<compile_context>
chip_gen: v5e
topology: v5e:2x2
jax: 0.10.0
libtpu: 0.0.40
codegen_flags: <defaults>
</compile_context>

<pallas_src>
import jax
import jax.numpy as jnp
from jax import lax
from jax.experimental import pallas as pl
from jax.experimental.pallas import tpu as pltpu


def _hhg_kernel(tok_ref, m_ref, out_ref):
    """One row tile: two 128-wide one-hot matmuls against the fused (256, C) matrix."""
    tile = tok_ref.shape[0]
    k = m_ref.shape[0] // 2                      # 128 codes per codebook (asserted in wrapper)

    toks = tok_ref[...]                          # (TILE, 1) int32
    low = toks & (k - 1)                         # tokens % 128
    high = toks >> 7                             # tokens // 128

    iota = lax.broadcasted_iota(jnp.int32, (tile, k), 1)     # (TILE, 128), lane-major
    oh_lo = (iota == low).astype(m_ref.dtype)
    oh_hi = (iota == high).astype(m_ref.dtype)

    acc = jnp.dot(oh_lo, m_ref[:k, :], preferred_element_type=jnp.float32)
    acc = acc + jnp.dot(oh_hi, m_ref[k:, :], preferred_element_type=jnp.float32)
    out_ref[...] = acc.astype(out_ref.dtype)


def hhg_codec_embedding(tokens, codebook, proj_w=None, proj_b=None, *,
                        tile_rows=1024, param_dtype=jnp.float32,
                        out_dtype=jnp.float32):
    """tokens: (B, T) int; codebook: (2, 128, D); proj_w: (2D, C) or None; proj_b: (C,) or None.

    proj_w=None reproduces the nn.Identity() path (out_channels == 2 * codebook_dim).
    out_dtype=jnp.bfloat16 halves HBM writeback if the consumer tolerates it (accumulation
    stays f32); default f32 matches the PyTorch module.
    """
    B, T = tokens.shape
    two, K, D = codebook.shape
    assert two == 2 and K == 128, "HHGCodecEmbedding expects a (2, 128, D) codebook"
    cb0 = codebook[0].astype(jnp.float32)
    cb1 = codebook[1].astype(jnp.float32)

    # --- Fuse gather + concat (+ Linear + bias) into one (256, C) matrix, outside the kernel.
    if proj_w is not None:
        C = int(proj_w.shape[1])
        bias = (proj_b if proj_b is not None
                else jnp.zeros((C,), jnp.float32)).astype(jnp.float32)
        hp = jax.lax.Precision.HIGHEST
        m_lo = jnp.dot(cb0, proj_w[:D].astype(jnp.float32), precision=hp) + 0.5 * bias
        m_hi = jnp.dot(cb1, proj_w[D:].astype(jnp.float32), precision=hp) + 0.5 * bias
    else:
        # Identity path: block-diagonal fused matrix so the halves CONCATENATE, not sum.
        C = 2 * D
        zeros = jnp.zeros((K, D), jnp.float32)
        m_lo = jnp.concatenate([cb0, zeros], axis=1)       # (128, 2D)
        m_hi = jnp.concatenate([zeros, cb1], axis=1)       # (128, 2D)
    m = jnp.concatenate([m_lo, m_hi], axis=0).astype(param_dtype)   # (256, C)

    # --- Row tiling: flatten (B, T), pick a large (but VMEM-safe) row tile.
    n = B * T
    tile = max(8, ((int(tile_rows) + 7) // 8) * 8)
    if n < tile:
        tile = max(8, ((n + 7) // 8) * 8)       # tiny inputs: single snug tile, no waste

    c_lanes = max(128, ((C + 127) // 128) * 128)            # lane-padded width in VMEM
    out_isz = jnp.dtype(out_dtype).itemsize
    m_isz = jnp.dtype(param_dtype).itemsize

    def vmem_est(t):
        return (2 * t * 128 * 4                  # token tiles (lane-padded), double-buffered
                + 2 * 2 * K * c_lanes * m_isz    # fused matrix, double-buffered
                + 2 * t * c_lanes * out_isz      # output tiles, double-buffered
                + 2 * t * 128 * 4                # two one-hot temporaries
                + t * c_lanes * 4)               # f32 accumulator

    # Keep the working set comfortably inside v7x's 64 MiB VMEM (also safe on v5e/v6e).
    while tile > 256 and vmem_est(tile) > (40 << 20):
        tile //= 2
    vmem_limit = int(min(64 << 20, max(16 << 20, vmem_est(tile) + (8 << 20))))

    n_pad = ((n + tile - 1) // tile) * tile
    toks = jnp.pad(tokens.reshape(n).astype(jnp.int32), (0, n_pad - n)).reshape(n_pad, 1)

    cost = pl.CostEstimate(
        flops=2 * n_pad * (2 * K) * C,
        transcendentals=0,
        bytes_accessed=int(n_pad * 4 + (2 * K) * C * m_isz + n_pad * C * out_isz),
    )

    out = pl.pallas_call(
        _hhg_kernel,
        out_shape=jax.ShapeDtypeStruct((n_pad, C), out_dtype),
        grid_spec=pltpu.PrefetchScalarGridSpec(
            num_scalar_prefetch=0,
            grid=(n_pad // tile,),
            in_specs=[
                pl.BlockSpec((tile, 1), lambda i: (i, 0)),        # token rows for this tile
                pl.BlockSpec((2 * K, C), lambda i: (0, 0)),       # fused matrix (grid-invariant)
            ],
            out_specs=pl.BlockSpec((tile, C), lambda i: (i, 0)),  # true C width: no pad+slice pass
        ),
        compiler_params=pltpu.CompilerParams(
            dimension_semantics=("parallel",),
            vmem_limit_bytes=vmem_limit),
        cost_estimate=cost,
    )(toks, m)

    if n_pad != n:
        out = out[:n]
    return out.reshape(B, T, C)


def hhg_codec_embedding_ref(tokens, codebook, proj_w=None, proj_b=None):
    """Pure-JAX f32 reference mirroring the PyTorch forward."""
    emb0 = codebook[0][tokens % 128]
    emb1 = codebook[1][tokens // 128]
    cat = jnp.concatenate([emb0, emb1], axis=-1)
    if proj_w is not None:
        cat = jnp.dot(cat, proj_w, precision=jax.lax.Precision.HIGHEST) + proj_b
    return cat


if __name__ == "__main__":
    key = jax.random.PRNGKey(0)
    k_cb, k_w, k_b, k_tok, k_tok2 = jax.random.split(key, 5)

    D = 32               # codebook_dim
    C = 48               # out_channels (!= 2*D -> exercises the nn.Linear path)
    B, T = 2, 8

    codebook = jax.random.normal(k_cb, (2, 128, D), dtype=jnp.float32)
    proj_w = jax.random.normal(k_w, (2 * D, C), dtype=jnp.float32) * 0.05
    proj_b = jax.random.normal(k_b, (C,), dtype=jnp.float32) * 0.05
    tokens = jax.random.randint(k_tok, (B, T), 0, 128 * 128, dtype=jnp.int32)

    # Linear-projection path.
    out = jax.block_until_ready(hhg_codec_embedding(tokens, codebook, proj_w, proj_b))
    ref = hhg_codec_embedding_ref(tokens, codebook, proj_w, proj_b)
    assert out.shape == (B, T, C)
    assert jnp.allclose(out, ref, atol=2e-2, rtol=2e-2), "linear-path mismatch vs reference"

    # Identity path (out_channels == 2 * codebook_dim -> nn.Identity in the module).
    out_id = jax.block_until_ready(hhg_codec_embedding(tokens, codebook))
    ref_id = hhg_codec_embedding_ref(tokens, codebook)
    assert out_id.shape == (B, T, 2 * D)
    assert jnp.allclose(out_id, ref_id, atol=2e-2, rtol=2e-2), "identity-path mismatch vs reference"

    # Larger run: multiple grid steps + row-remainder handling.
    tokens2 = jax.random.randint(k_tok2, (3, 700), 0, 128 * 128, dtype=jnp.int32)
    out2 = jax.block_until_ready(hhg_codec_embedding(tokens2, codebook, proj_w, proj_b))
    ref2 = hhg_codec_embedding_ref(tokens2, codebook, proj_w, proj_b)
    assert out2.shape == (3, 700, C)
    assert jnp.allclose(out2, ref2, atol=2e-2, rtol=2e-2), "multi-tile mismatch vs reference"

    print("KERNEL_OK")
</pallas_src>

<mosaic_0001>
module attributes {stable_mosaic.version = 11 : i64} {
  func.func @_hhg_kernel(%arg0: i32, %arg1: memref<16x1xi32, #tpu.memory_space<vmem>>, %arg2: memref<256x48xf32, #tpu.memory_space<vmem>>, %arg3: memref<16x48xf32, #tpu.memory_space<vmem>>) attributes {dimension_semantics = [#tpu.dimension_semantics<parallel>], iteration_bounds = array<i64: 1>, scalar_prefetch = 0 : i64, scratch_operands = 0 : i64, tpu.core_type = #tpu.core_type<tc>, window_params = [{transform_indices = @transform_0, window_bounds = array<i64: 16, 1>}, {pipeline_mode = #tpu.pipeline_mode<synchronous>, transform_indices = @transform_1, window_bounds = array<i64: 256, 48>}, {transform_indices = @transform_2, window_bounds = array<i64: 16, 48>}]} {
    %c0 = arith.constant 0 : index
    %c0_0 = arith.constant 0 : index
    %0 = vector.load %arg1[%c0, %c0_0] : memref<16x1xi32, #tpu.memory_space<vmem>>, vector<16x1xi32>
    %c127_i32 = arith.constant 127 : i32
    %1 = vector.broadcast %c127_i32 : i32 to vector<16x1xi32>
    %2 = arith.andi %0, %1 : vector<16x1xi32>
    %c7_i32 = arith.constant 7 : i32
    %3 = vector.broadcast %c7_i32 : i32 to vector<16x1xi32>
    %4 = arith.shrsi %0, %3 : vector<16x1xi32>
    %5 = tpu.iota {dimensions = array<i32: 1>} : vector<16x128xi32>
    %6 = vector.broadcast %2 : vector<16x1xi32> to vector<16x128xi32>
    %7 = arith.cmpi eq, %5, %6 : vector<16x128xi32>
    %8 = arith.extui %7 : vector<16x128xi1> to vector<16x128xi32>
    %9 = arith.sitofp %8 : vector<16x128xi32> to vector<16x128xf32>
    %10 = vector.broadcast %4 : vector<16x1xi32> to vector<16x128xi32>
    %11 = arith.cmpi eq, %5, %10 : vector<16x128xi32>
    %12 = arith.extui %11 : vector<16x128xi1> to vector<16x128xi32>
    %13 = arith.sitofp %12 : vector<16x128xi32> to vector<16x128xf32>
    %c0_1 = arith.constant 0 : index
    %c0_2 = arith.constant 0 : index
    %14 = vector.load %arg2[%c0_1, %c0_2] : memref<256x48xf32, #tpu.memory_space<vmem>>, vector<128x48xf32>
    %cst = arith.constant dense<0.000000e+00> : vector<16x48xf32>
    %15 = tpu.matmul %9, %14, %cst {dimension_numbers = #tpu.dot_dimension_numbers<[1], [0], [0], [1], [0, 0, 1, 1], [], []>} : vector<16x128xf32>, vector<128x48xf32>, vector<16x48xf32> -> vector<16x48xf32>
    %c128 = arith.constant 128 : index
    %c0_3 = arith.constant 0 : index
    %16 = vector.load %arg2[%c128, %c0_3] : memref<256x48xf32, #tpu.memory_space<vmem>>, vector<128x48xf32>
    %cst_4 = arith.constant dense<0.000000e+00> : vector<16x48xf32>
    %17 = tpu.matmul %13, %16, %cst_4 {dimension_numbers = #tpu.dot_dimension_numbers<[1], [0], [0], [1], [0, 0, 1, 1], [], []>} : vector<16x128xf32>, vector<128x48xf32>, vector<16x48xf32> -> vector<16x48xf32>
    %18 = arith.addf %15, %17 : vector<16x48xf32>
    %c0_5 = arith.constant 0 : index
    %c0_6 = arith.constant 0 : index
    %19 = vector.load %arg3[%c0_5, %c0_6] : memref<16x48xf32, #tpu.memory_space<vmem>>, vector<16x48xf32>
    tpu.vector_store %arg3[%c0_5, %c0_6], %18 {strides = array<i32>} : memref<16x48xf32, #tpu.memory_space<vmem>>, vector<16x48xf32>,
    return
  }
  func.func @transform_0(%arg0: i32) -> (i32, i32) {
    %c0_i32 = arith.constant 0 : i32
    %c0_i32_0 = arith.constant 0 : i32
    return %arg0, %c0_i32 : i32, i32
  }
  func.func @transform_1(%arg0: i32) -> (i32, i32) {
    %c0_i32 = arith.constant 0 : i32
    %c0_i32_0 = arith.constant 0 : i32
    %c0_i32_1 = arith.constant 0 : i32
    return %c0_i32, %c0_i32_0 : i32, i32
  }
  func.func @transform_2(%arg0: i32) -> (i32, i32) {
    %c0_i32 = arith.constant 0 : i32
    %c0_i32_0 = arith.constant 0 : i32
    return %arg0, %c0_i32 : i32, i32
  }
}

</mosaic_0001>

<llo_original>
// kernel: tpu_custom_call.1
$region0: #{tpu_custom_call.1}
  #allocation0 [shape = 'u32[]', space=smem, size = 0x4, offset = 0x4, fixed_abs, tag = 'smem constant byte address 0x4 - core index']
  #allocation1 [shape = 'u32[72,128]{1,0:T(1,128)}', space=vmem, size = 0x9000, scoped, tag = 'internal scratch']
  %s0 = inlined_call_operand.vmem [shape: s32[16,1], index: 0, kind: input, shape index: {}]
  %s1 = inlined_call_operand.vmem [shape: f32[256,48], index: 1, kind: input, shape index: {}]
  %s2 = inlined_call_operand.hbm [shape: f32[16,48], index: 2, kind: output, shape index: {}]
  %s3 = sld [smem:[#allocation0]]
  $region18: #{tpu_custom_call.1} parent=0
    _
  %s5 = ssub.s32 1, %s3
  %s6 = scalar_select 0, %s5, %s3
  $region1: #{tpu_custom_call.1} parent=0
    #allocation2 [shape = 'u8[8192]{0}', space=vmem, size = 0x2000, scoped, tag = 'output window, operand 0, single buffered']
    #allocation3 [shape = 's32[1]{0}', space=sflag, size = 0x4, scoped, tag = 'scoped memory for tpu_custom_call.1']
    %7 = vsyncpa [#allocation3], 0
    // Predicated region
    $region2: #{tpu_custom_call.1} parent=1 // pred_check
      _
    $region3: #{tpu_custom_call.1} parent=1 // pred_check_branch
      %9 = sbr.rel (0) target = $region5
    $region4: #{tpu_custom_call.1} parent=1 // pred_region
      _
    $region5: #{tpu_custom_call.1} parent=1 // pred_fallthru
      _
    // Predicated region
    $region6: #{tpu_custom_call.1} parent=1 // pred_check
      _
    $region7: #{tpu_custom_call.1} parent=1 // pred_check_branch
      %11 = sbr.rel (0) target = $region9
    $region8: #{tpu_custom_call.1} parent=1 // pred_region
      _
    $region9: #{tpu_custom_call.1} parent=1 // pred_fallthru
      _
    %v12 = vld [vmem:[%s0] sm:$0xff]
    %v13 = vld [vmem:[%s0 + $0x8] sm:$0xff]
    %v14 = vand.u32 %v12, 127
    %v15 = vand.u32 %v13, 127
    %v16 = vshra.s32 %v12, 7
    %v17 = vshra.s32 %v13, 7
    %v18 = vlaneseq
    %v19 = vand.u32 %v18, 127
    %20 = vset.pattern.permute.xlu0 0
    %21 = vperm.xlu0 %20, %v14
    %v22 = vpop.permute.xlu0 %21
    %23 = vset.pattern.permute.xlu0 0
    %24 = vperm.xlu0 %23, %v15
    %v25 = vpop.permute.xlu0 %24
    %vm26 = vcmp.eq.s32.totalorder %v19, %v22
    %vm27 = vcmp.eq.s32.totalorder %v19, %v25
    %v28 = vsel %vm26, 1, 0
    %v29 = vsel %vm27, 1, 0
    %v30 = vcvt.s32.f32 %v28
    %v31 = vcvt.s32.f32 %v29
    %32 = vset.pattern.permute.xlu0 0
    %33 = vperm.xlu0 %32, %v16
    %v34 = vpop.permute.xlu0 %33
    %35 = vset.pattern.permute.xlu0 0
    %36 = vperm.xlu0 %35, %v17
    %v37 = vpop.permute.xlu0 %36
    %vm38 = vcmp.eq.s32.totalorder %v19, %v34
    %vm39 = vcmp.eq.s32.totalorder %v19, %v37
    %v40 = vsel %vm38, 1, 0
    %v41 = vsel %vm39, 1, 0
    %v42 = vcvt.s32.f32 %v40
    %v43 = vcvt.s32.f32 %v41
    %v44 = vld [vmem:[%s1] sm:$0xff]
    %v45 = vld [vmem:[%s1 + $0x8] sm:$0xff]
    %v46 = vld [vmem:[%s1 + $0x10] sm:$0xff]
    %v47 = vld [vmem:[%s1 + $0x18] sm:$0xff]
    %v48 = vld [vmem:[%s1 + $0x20] sm:$0xff]
    %v49 = vld [vmem:[%s1 + $0x28] sm:$0xff]
    %v50 = vld [vmem:[%s1 + $0x30] sm:$0xff]
    %v51 = vld [vmem:[%s1 + $0x38] sm:$0xff]
    %v52 = vld [vmem:[%s1 + $0x40] sm:$0xff]
    %v53 = vld [vmem:[%s1 + $0x48] sm:$0xff]
    %v54 = vld [vmem:[%s1 + $0x50] sm:$0xff]
    %v55 = vld [vmem:[%s1 + $0x58] sm:$0xff]
    %v56 = vld [vmem:[%s1 + $0x60] sm:$0xff]
    %v57 = vld [vmem:[%s1 + $0x68] sm:$0xff]
    %v58 = vld [vmem:[%s1 + $0x70] sm:$0xff]
    %v59 = vld [vmem:[%s1 + $0x78] sm:$0xff]
    %v60 = vld [vmem:[%s1 + $0x80] sm:$0xff]
    %v61 = vld [vmem:[%s1 + $0x88] sm:$0xff]
    %v62 = vld [vmem:[%s1 + $0x90] sm:$0xff]
    %v63 = vld [vmem:[%s1 + $0x98] sm:$0xff]
    %v64 = vld [vmem:[%s1 + $0xa0] sm:$0xff]
    %v65 = vld [vmem:[%s1 + $0xa8] sm:$0xff]
    %v66 = vld [vmem:[%s1 + $0xb0] sm:$0xff]
    %v67 = vld [vmem:[%s1 + $0xb8] sm:$0xff]
    %v68 = vld [vmem:[%s1 + $0xc0] sm:$0xff]
    %v69 = vld [vmem:[%s1 + $0xc8] sm:$0xff]
    %v70 = vld [vmem:[%s1 + $0xd0] sm:$0xff]
    %v71 = vld [vmem:[%s1 + $0xd8] sm:$0xff]
    %v72 = vld [vmem:[%s1 + $0xe0] sm:$0xff]
    %v73 = vld [vmem:[%s1 + $0xe8] sm:$0xff]
    %v74 = vld [vmem:[%s1 + $0xf0] sm:$0xff]
    %v75 = vld [vmem:[%s1 + $0xf8] sm:$0xff]
    %76 = vmatpush.msra.mxu0 %v75
    %77 = vmatpush.msra.mxu0 %v74
    %78 = vmatpush.msra.mxu0 %v73
    %79 = vmatpush.msra.mxu0 %v72
    %80 = vmatpush.msra.mxu0 %v71
    %81 = vmatpush.msra.mxu0 %v70
    %82 = vmatpush.msra.mxu0 %v69
    %83 = vmatpush.msra.mxu0 %v68
    %84 = vmatpush.msra.mxu0 %v67
    %85 = vmatpush.msra.mxu0 %v66
    %86 = vmatpush.msra.mxu0 %v65
    %87 = vmatpush.msra.mxu0 %v64
    %88 = vmatpush.msra.mxu0 %v63
    %89 = vmatpush.msra.mxu0 %v62
    %90 = vmatpush.msra.mxu0 %v61
    %91 = vmatpush.msra.mxu0 %v60
    %92 = vmatmul.f32.gmra.mxu0 %v42
    %v93 = vpop.f32.mrf.mxu0
    %v94 = vadd.f32 0.0, %v93
    %95 = vmatmul.f32.gmra.mxu0 %v43
    %v96 = vpop.f32.mrf.mxu0
    %v97 = vadd.f32 0.0, %v96
    %98 = vdwg.mxu0
    %99 = vmatpush.msra.mxu0 %v59
    %100 = vmatpush.msra.mxu0 %v58
    %101 = vmatpush.msra.mxu0 %v57
    %102 = vmatpush.msra.mxu0 %v56
    %103 = vmatpush.msra.mxu0 %v55
    %104 = vmatpush.msra.mxu0 %v54
    %105 = vmatpush.msra.mxu0 %v53
    %106 = vmatpush.msra.mxu0 %v52
    %107 = vmatpush.msra.mxu0 %v51
    %108 = vmatpush.msra.mxu0 %v50
    %109 = vmatpush.msra.mxu0 %v49
    %110 = vmatpush.msra.mxu0 %v48
    %111 = vmatpush.msra.mxu0 %v47
    %112 = vmatpush.msra.mxu0 %v46
    %113 = vmatpush.msra.mxu0 %v45
    %114 = vmatpush.msra.mxu0 %v44
    %115 = vmatmul.f32.gmra.mxu0 %v30
    %v116 = vpop.f32.mrf.mxu0
    %v117 = vadd.f32 %v94, %v116
    %118 = vmatmul.f32.gmra.mxu0 %v31
    %v119 = vpop.f32.mrf.mxu0
    %v120 = vadd.f32 %v97, %v119
    %121 = vdwg.mxu0
    %vm122 = vcmask 392192
    %123 = vst.msk [vmem:[#allocation2] sm:$0xff] %vm122, %v117
    %124 = vst.msk [vmem:[#allocation2 + $0x8] sm:$0xff] %vm122, %v120
    // Predicated region
    $region10: #{tpu_custom_call.1} parent=1 // pred_check
      _
    $region11: #{tpu_custom_call.1} parent=1 // pred_check_branch
      %126 = sbr.rel (0) target = $region13
    $region12: #{tpu_custom_call.1} parent=1 // pred_region
      %128 = vsyncadd [#allocation3], 0
      %s129 = sshll.u32 [#allocation2], 4
      %s130 = int_to_ptr.vmem [resolvable:$true] %s129
      %s131 = sshll.u32 %s2, 4
      %s132 = int_to_ptr.hbm [resolvable:$true] %s131
      %137 = dma.vmem_to_hbm [thread:$0]  %s130, 256, %s132, [#allocation3], 128, 128, 8
    $region13: #{tpu_custom_call.1} parent=1 // pred_fallthru
      _
    // Predicated region
    $region14: #{tpu_custom_call.1} parent=1 // pred_check
      _
    $region15: #{tpu_custom_call.1} parent=1 // pred_check_branch
      %139 = sbr.rel (0) target = $region17
    $region16: #{tpu_custom_call.1} parent=1 // pred_region
      %141 = dma.done [#allocation3], 256
    $region17: #{tpu_custom_call.1} parent=1 // pred_fallthru
      _
    %142 = vsyncpa [#allocation3], 1

</llo_original>
